<compile_context>
chip_gen: v7x
topology: tpu7x:2x2x1
jax: 0.10.0
libtpu: 0.0.40
codegen_flags: <defaults>
</compile_context>

<pallas_src>
import jax
import jax.numpy as jnp
from jax.experimental import pallas as pl
from jax.experimental.pallas import tpu as pltpu

# true layer widths of the PyTorch module
IN_DIM, H1, H2, H3, OUT_DIM = 2, 8, 4, 2, 1

SUB = 8        # sublanes per vreg -- batch is packed here too
CHUNK = 512    # lanes per inner-loop chunk (multiple of 128)
MAX_TB = 8192  # max lanes per grid step (=> up to 65536 batch elems / step)

# flat parameter packing: [W1|b1|W2|b2|W3|b3|W4|b4], W row-major (fan_in, fan_out)
OFF_W1 = 0
OFF_B1 = OFF_W1 + IN_DIM * H1
OFF_W2 = OFF_B1 + H1
OFF_B2 = OFF_W2 + H1 * H2
OFF_W3 = OFF_B2 + H2
OFF_B3 = OFF_W3 + H2 * H3
OFF_W4 = OFF_B3 + H3
OFF_B4 = OFF_W4 + H3 * OUT_DIM
N_PARAMS = OFF_B4 + OUT_DIM  # = 73 scalars


def policy_mlp_kernel(p_ref, x_ref, o_ref):
    """One (IN_DIM, 8, TB) batch tile through all four layers.

    p_ref : SMEM f32[N_PARAMS]     packed weights / biases (scalar reads)
    x_ref : VMEM (IN_DIM, 8, TB)   batch packed on sublanes + lanes
    o_ref : VMEM (8, TB)           tanh output slab (unmasked (8,128) stores)
    """
    tb = x_ref.shape[2]
    chunk = CHUNK if tb >= CHUNK else tb
    n_chunks = tb // chunk

    # Hoisted out of the chunk loop: read all 73 packed scalars once per step.
    p = [p_ref[i] for i in range(N_PARAMS)]

    def dense(inp, fan_in, fan_out, w_off, b_off, relu):
        outs = []
        for j in range(fan_out):                      # fully unrolled: <= 32 FMAs / layer
            acc = inp[0] * p[w_off + j]
            for i in range(1, fan_in):
                acc = acc + inp[i] * p[w_off + i * fan_out + j]
            acc = acc + p[b_off + j]
            outs.append(jnp.maximum(acc, 0.0) if relu else acc)
        return outs

    @pl.loop(0, n_chunks)
    def _(c):
        off = pl.multiple_of(c * chunk, chunk)
        xc = x_ref[:, :, pl.ds(off, chunk)]           # (IN_DIM, 8, chunk) load
        rows = [xc[i] for i in range(IN_DIM)]         # list of (8, chunk) slabs
        h = dense(rows, IN_DIM, H1, OFF_W1, OFF_B1, relu=True)
        h = dense(h, H1, H2, OFF_W2, OFF_B2, relu=True)
        h = dense(h, H2, H3, OFF_W3, OFF_B3, relu=True)
        out = dense(h, H3, OUT_DIM, OFF_W4, OFF_B4, relu=False)
        o_ref[:, pl.ds(off, chunk)] = jnp.tanh(out[0])  # EUP tanh, lane-dense store


def pack_params(params):
    """Pack the four (W, b) pairs into one flat f32[N_PARAMS] array.  Done ONCE,
    outside the per-call hot path (no per-forward padding / scatter)."""
    flat = []
    for w, b in params:
        flat.append(jnp.asarray(w, jnp.float32).reshape(-1))
        flat.append(jnp.asarray(b, jnp.float32).reshape(-1))
    packed = jnp.concatenate(flat)
    assert packed.shape == (N_PARAMS,), packed.shape
    return packed


def _round_up(v, m):
    return ((v + m - 1) // m) * m


def _tile_lanes(batch):
    """Static (per-shape) choice of (total padded lanes, lanes per grid step)."""
    lanes = _round_up(max((batch + SUB - 1) // SUB, 1), CHUNK)
    if lanes <= CHUNK:
        return lanes, lanes                           # one small step
    # aim for a >= 2-step grid (v7x megacore) while capping the step at MAX_TB
    tb = min(MAX_TB, _round_up(lanes // 2, CHUNK))
    lanes = _round_up(lanes, tb)
    return lanes, tb


@jax.jit
def policy_forward(x, packed_params):
    """x: (B, IN_DIM) float32 -> (B, OUT_DIM) float32 (tanh output)."""
    # TODO(synk): jit re-specializes per batch size; bucket B upstream if the RL
    # loop produces many distinct batch sizes.
    B = x.shape[0]
    lanes, tb = _tile_lanes(B)
    Bp = SUB * lanes

    # Single fused pad of the feature-major view; the reshape packs the batch
    # onto sublanes + lanes.  (Produce observations feature-major upstream to
    # drop the transpose entirely.)
    xt = jnp.pad(x.astype(jnp.float32).T, ((0, 0), (0, Bp - B)))
    xin = xt.reshape(IN_DIM, SUB, lanes)

    out = pl.pallas_call(
        policy_mlp_kernel,
        out_shape=jax.ShapeDtypeStruct((SUB, lanes), jnp.float32),
        grid_spec=pltpu.PrefetchScalarGridSpec(
            num_scalar_prefetch=0,
            grid=(lanes // tb,),
            in_specs=[
                pl.BlockSpec(memory_space=pltpu.MemorySpace.SMEM),      # packed params
                pl.BlockSpec((IN_DIM, SUB, tb), lambda i: (0, 0, i)),   # batch tile
            ],
            out_specs=pl.BlockSpec((SUB, tb), lambda i: (0, i)),
        ),
        compiler_params=pltpu.CompilerParams(
            dimension_semantics=("parallel",)),       # batch steps shard across TCs (v7x)
    )(packed_params, xin)

    return out.reshape(Bp)[:B].reshape(B, OUT_DIM)


def init_params(key):
    """Deterministic init mimicking torch.nn.Linear (U[-1/sqrt(fan_in), 1/sqrt(fan_in)])."""
    dims = [(IN_DIM, H1), (H1, H2), (H2, H3), (H3, OUT_DIM)]
    params = []
    for fan_in, fan_out in dims:
        key, kw, kb = jax.random.split(key, 3)
        bound = float(fan_in) ** -0.5
        w = jax.random.uniform(kw, (fan_in, fan_out), jnp.float32, -bound, bound)
        b = jax.random.uniform(kb, (fan_out,), jnp.float32, -bound, bound)
        params.append((w, b))
    log_std = jnp.full((1,), -1.0, jnp.float32)  # module parameter, unused by forward()
    return params, log_std


def reference_forward(x, params):
    (w1, b1), (w2, b2), (w3, b3), (w4, b4) = params
    hi = jax.lax.Precision.HIGHEST  # exact f32 reference (avoid bf16 MXU passes)
    h = jnp.maximum(jnp.dot(x, w1, precision=hi) + b1, 0.0)
    h = jnp.maximum(jnp.dot(h, w2, precision=hi) + b2, 0.0)
    h = jnp.maximum(jnp.dot(h, w3, precision=hi) + b3, 0.0)
    return jnp.tanh(jnp.dot(h, w4, precision=hi) + b4)


if __name__ == "__main__":
    key = jax.random.PRNGKey(0)
    key, kx_small, kx_big = jax.random.split(key, 3)
    params, log_std = init_params(key)
    packed = pack_params(params)  # packed once, reused for every forward call

    # small batch of 2-D observations (mountain-car obs space is 2-D)
    x_small = jax.random.normal(kx_small, (2, IN_DIM), jnp.float32)
    out_small = jax.block_until_ready(policy_forward(x_small, packed))
    ref_small = reference_forward(x_small, params)
    assert out_small.shape == (2, OUT_DIM), out_small.shape
    assert jnp.allclose(out_small, ref_small, atol=1e-5, rtol=1e-5), (out_small, ref_small)

    # larger batch: exercises sublane+lane padding and a 2-step "parallel" grid
    x_big = jax.random.normal(kx_big, (5000, IN_DIM), jnp.float32)
    out_big = jax.block_until_ready(policy_forward(x_big, packed))
    ref_big = reference_forward(x_big, params)
    assert out_big.shape == (5000, OUT_DIM), out_big.shape
    assert jnp.allclose(out_big, ref_big, atol=1e-5, rtol=1e-5)

    # TODO(synk): get_action / get_probs (Normal sampling + log_prob) stay in plain JAX;
    # only forward() is the Pallas hot path.
    print("KERNEL_OK")
</pallas_src>

<mosaic_0001>
module attributes {stable_mosaic.version = 11 : i64} {
  func.func @policy_mlp_kernel(%arg0: i32, %arg1: memref<73xf32, #tpu.memory_space<smem>>, %arg2: memref<2x8x512xf32, #tpu.memory_space<vmem>>, %arg3: memref<8x512xf32, #tpu.memory_space<vmem>>) attributes {dimension_semantics = [#tpu.dimension_semantics<parallel>], iteration_bounds = array<i64: 1>, scalar_prefetch = 0 : i64, scratch_operands = 0 : i64, tpu.core_type = #tpu.core_type<tc>, window_params = [{transform_indices = @transform_0, window_bounds = array<i64: 73>}, {transform_indices = @transform_1, window_bounds = array<i64: 2, 8, 512>}, {transform_indices = @transform_2, window_bounds = array<i64: 8, 512>}]} {
    %c0 = arith.constant 0 : index
    %0 = memref.load %arg1[%c0] : memref<73xf32, #tpu.memory_space<smem>>
    %c1 = arith.constant 1 : index
    %1 = memref.load %arg1[%c1] : memref<73xf32, #tpu.memory_space<smem>>
    %c2 = arith.constant 2 : index
    %2 = memref.load %arg1[%c2] : memref<73xf32, #tpu.memory_space<smem>>
    %c3 = arith.constant 3 : index
    %3 = memref.load %arg1[%c3] : memref<73xf32, #tpu.memory_space<smem>>
    %c4 = arith.constant 4 : index
    %4 = memref.load %arg1[%c4] : memref<73xf32, #tpu.memory_space<smem>>
    %c5 = arith.constant 5 : index
    %5 = memref.load %arg1[%c5] : memref<73xf32, #tpu.memory_space<smem>>
    %c6 = arith.constant 6 : index
    %6 = memref.load %arg1[%c6] : memref<73xf32, #tpu.memory_space<smem>>
    %c7 = arith.constant 7 : index
    %7 = memref.load %arg1[%c7] : memref<73xf32, #tpu.memory_space<smem>>
    %c8 = arith.constant 8 : index
    %8 = memref.load %arg1[%c8] : memref<73xf32, #tpu.memory_space<smem>>
    %c9 = arith.constant 9 : index
    %9 = memref.load %arg1[%c9] : memref<73xf32, #tpu.memory_space<smem>>
    %c10 = arith.constant 10 : index
    %10 = memref.load %arg1[%c10] : memref<73xf32, #tpu.memory_space<smem>>
    %c11 = arith.constant 11 : index
    %11 = memref.load %arg1[%c11] : memref<73xf32, #tpu.memory_space<smem>>
    %c12 = arith.constant 12 : index
    %12 = memref.load %arg1[%c12] : memref<73xf32, #tpu.memory_space<smem>>
    %c13 = arith.constant 13 : index
    %13 = memref.load %arg1[%c13] : memref<73xf32, #tpu.memory_space<smem>>
    %c14 = arith.constant 14 : index
    %14 = memref.load %arg1[%c14] : memref<73xf32, #tpu.memory_space<smem>>
    %c15 = arith.constant 15 : index
    %15 = memref.load %arg1[%c15] : memref<73xf32, #tpu.memory_space<smem>>
    %c16 = arith.constant 16 : index
    %16 = memref.load %arg1[%c16] : memref<73xf32, #tpu.memory_space<smem>>
    %c17 = arith.constant 17 : index
    %17 = memref.load %arg1[%c17] : memref<73xf32, #tpu.memory_space<smem>>
    %c18 = arith.constant 18 : index
    %18 = memref.load %arg1[%c18] : memref<73xf32, #tpu.memory_space<smem>>
    %c19 = arith.constant 19 : index
    %19 = memref.load %arg1[%c19] : memref<73xf32, #tpu.memory_space<smem>>
    %c20 = arith.constant 20 : index
    %20 = memref.load %arg1[%c20] : memref<73xf32, #tpu.memory_space<smem>>
    %c21 = arith.constant 21 : index
    %21 = memref.load %arg1[%c21] : memref<73xf32, #tpu.memory_space<smem>>
    %c22 = arith.constant 22 : index
    %22 = memref.load %arg1[%c22] : memref<73xf32, #tpu.memory_space<smem>>
    %c23 = arith.constant 23 : index
    %23 = memref.load %arg1[%c23] : memref<73xf32, #tpu.memory_space<smem>>
    %c24 = arith.constant 24 : index
    %24 = memref.load %arg1[%c24] : memref<73xf32, #tpu.memory_space<smem>>
    %c25 = arith.constant 25 : index
    %25 = memref.load %arg1[%c25] : memref<73xf32, #tpu.memory_space<smem>>
    %c26 = arith.constant 26 : index
    %26 = memref.load %arg1[%c26] : memref<73xf32, #tpu.memory_space<smem>>
    %c27 = arith.constant 27 : index
    %27 = memref.load %arg1[%c27] : memref<73xf32, #tpu.memory_space<smem>>
    %c28 = arith.constant 28 : index
    %28 = memref.load %arg1[%c28] : memref<73xf32, #tpu.memory_space<smem>>
    %c29 = arith.constant 29 : index
    %29 = memref.load %arg1[%c29] : memref<73xf32, #tpu.memory_space<smem>>
    %c30 = arith.constant 30 : index
    %30 = memref.load %arg1[%c30] : memref<73xf32, #tpu.memory_space<smem>>
    %c31 = arith.constant 31 : index
    %31 = memref.load %arg1[%c31] : memref<73xf32, #tpu.memory_space<smem>>
    %c32 = arith.constant 32 : index
    %32 = memref.load %arg1[%c32] : memref<73xf32, #tpu.memory_space<smem>>
    %c33 = arith.constant 33 : index
    %33 = memref.load %arg1[%c33] : memref<73xf32, #tpu.memory_space<smem>>
    %c34 = arith.constant 34 : index
    %34 = memref.load %arg1[%c34] : memref<73xf32, #tpu.memory_space<smem>>
    %c35 = arith.constant 35 : index
    %35 = memref.load %arg1[%c35] : memref<73xf32, #tpu.memory_space<smem>>
    %c36 = arith.constant 36 : index
    %36 = memref.load %arg1[%c36] : memref<73xf32, #tpu.memory_space<smem>>
    %c37 = arith.constant 37 : index
    %37 = memref.load %arg1[%c37] : memref<73xf32, #tpu.memory_space<smem>>
    %c38 = arith.constant 38 : index
    %38 = memref.load %arg1[%c38] : memref<73xf32, #tpu.memory_space<smem>>
    %c39 = arith.constant 39 : index
    %39 = memref.load %arg1[%c39] : memref<73xf32, #tpu.memory_space<smem>>
    %c40 = arith.constant 40 : index
    %40 = memref.load %arg1[%c40] : memref<73xf32, #tpu.memory_space<smem>>
    %c41 = arith.constant 41 : index
    %41 = memref.load %arg1[%c41] : memref<73xf32, #tpu.memory_space<smem>>
    %c42 = arith.constant 42 : index
    %42 = memref.load %arg1[%c42] : memref<73xf32, #tpu.memory_space<smem>>
    %c43 = arith.constant 43 : index
    %43 = memref.load %arg1[%c43] : memref<73xf32, #tpu.memory_space<smem>>
    %c44 = arith.constant 44 : index
    %44 = memref.load %arg1[%c44] : memref<73xf32, #tpu.memory_space<smem>>
    %c45 = arith.constant 45 : index
    %45 = memref.load %arg1[%c45] : memref<73xf32, #tpu.memory_space<smem>>
    %c46 = arith.constant 46 : index
    %46 = memref.load %arg1[%c46] : memref<73xf32, #tpu.memory_space<smem>>
    %c47 = arith.constant 47 : index
    %47 = memref.load %arg1[%c47] : memref<73xf32, #tpu.memory_space<smem>>
    %c48 = arith.constant 48 : index
    %48 = memref.load %arg1[%c48] : memref<73xf32, #tpu.memory_space<smem>>
    %c49 = arith.constant 49 : index
    %49 = memref.load %arg1[%c49] : memref<73xf32, #tpu.memory_space<smem>>
    %c50 = arith.constant 50 : index
    %50 = memref.load %arg1[%c50] : memref<73xf32, #tpu.memory_space<smem>>
    %c51 = arith.constant 51 : index
    %51 = memref.load %arg1[%c51] : memref<73xf32, #tpu.memory_space<smem>>
    %c52 = arith.constant 52 : index
    %52 = memref.load %arg1[%c52] : memref<73xf32, #tpu.memory_space<smem>>
    %c53 = arith.constant 53 : index
    %53 = memref.load %arg1[%c53] : memref<73xf32, #tpu.memory_space<smem>>
    %c54 = arith.constant 54 : index
    %54 = memref.load %arg1[%c54] : memref<73xf32, #tpu.memory_space<smem>>
    %c55 = arith.constant 55 : index
    %55 = memref.load %arg1[%c55] : memref<73xf32, #tpu.memory_space<smem>>
    %c56 = arith.constant 56 : index
    %56 = memref.load %arg1[%c56] : memref<73xf32, #tpu.memory_space<smem>>
    %c57 = arith.constant 57 : index
    %57 = memref.load %arg1[%c57] : memref<73xf32, #tpu.memory_space<smem>>
    %c58 = arith.constant 58 : index
    %58 = memref.load %arg1[%c58] : memref<73xf32, #tpu.memory_space<smem>>
    %c59 = arith.constant 59 : index
    %59 = memref.load %arg1[%c59] : memref<73xf32, #tpu.memory_space<smem>>
    %c60 = arith.constant 60 : index
    %60 = memref.load %arg1[%c60] : memref<73xf32, #tpu.memory_space<smem>>
    %c61 = arith.constant 61 : index
    %61 = memref.load %arg1[%c61] : memref<73xf32, #tpu.memory_space<smem>>
    %c62 = arith.constant 62 : index
    %62 = memref.load %arg1[%c62] : memref<73xf32, #tpu.memory_space<smem>>
    %c63 = arith.constant 63 : index
    %63 = memref.load %arg1[%c63] : memref<73xf32, #tpu.memory_space<smem>>
    %c64 = arith.constant 64 : index
    %64 = memref.load %arg1[%c64] : memref<73xf32, #tpu.memory_space<smem>>
    %c65 = arith.constant 65 : index
    %65 = memref.load %arg1[%c65] : memref<73xf32, #tpu.memory_space<smem>>
    %c66 = arith.constant 66 : index
    %66 = memref.load %arg1[%c66] : memref<73xf32, #tpu.memory_space<smem>>
    %c67 = arith.constant 67 : index
    %67 = memref.load %arg1[%c67] : memref<73xf32, #tpu.memory_space<smem>>
    %c68 = arith.constant 68 : index
    %68 = memref.load %arg1[%c68] : memref<73xf32, #tpu.memory_space<smem>>
    %c69 = arith.constant 69 : index
    %69 = memref.load %arg1[%c69] : memref<73xf32, #tpu.memory_space<smem>>
    %c70 = arith.constant 70 : index
    %70 = memref.load %arg1[%c70] : memref<73xf32, #tpu.memory_space<smem>>
    %c71 = arith.constant 71 : index
    %71 = memref.load %arg1[%c71] : memref<73xf32, #tpu.memory_space<smem>>
    %c72 = arith.constant 72 : index
    %72 = memref.load %arg1[%c72] : memref<73xf32, #tpu.memory_space<smem>>
    %c0_i32 = arith.constant 0 : i32
    %c1_i32 = arith.constant 1 : i32
    %73 = arith.muli %c0_i32, %c1_i32 : i32
    %c0_i32_0 = arith.constant 0 : i32
    %74 = arith.addi %c0_i32_0, %73 : i32
    %c512_i32 = arith.constant 512 : i32
    %75 = arith.muli %74, %c512_i32 : i32
    %76 = tpu.assume_multiple %75, 512 : i32
    %c0_1 = arith.constant 0 : index
    %c0_2 = arith.constant 0 : index
    %77 = arith.index_cast %76 : i32 to index
    %78 = vector.load %arg2[%c0_1, %c0_2, %77] : memref<2x8x512xf32, #tpu.memory_space<vmem>>, vector<2x8x512xf32>
    %79 = vector.extract_strided_slice %78 {offsets = [0, 0, 0], sizes = [1, 8, 512], strides = [1, 1, 1]} : vector<2x8x512xf32> to vector<1x8x512xf32>
    %80 = vector.shape_cast %79 : vector<1x8x512xf32> to vector<8x512xf32>
    %81 = vector.extract_strided_slice %78 {offsets = [1, 0, 0], sizes = [1, 8, 512], strides = [1, 1, 1]} : vector<2x8x512xf32> to vector<1x8x512xf32>
    %82 = vector.shape_cast %81 : vector<1x8x512xf32> to vector<8x512xf32>
    %83 = vector.broadcast %0 : f32 to vector<8x512xf32>
    %84 = arith.mulf %80, %83 : vector<8x512xf32>
    %85 = vector.broadcast %8 : f32 to vector<8x512xf32>
    %86 = arith.mulf %82, %85 : vector<8x512xf32>
    %87 = arith.addf %84, %86 : vector<8x512xf32>
    %88 = vector.broadcast %16 : f32 to vector<8x512xf32>
    %89 = arith.addf %87, %88 : vector<8x512xf32>
    %cst = arith.constant 0.000000e+00 : f32
    %90 = vector.broadcast %cst : f32 to vector<8x512xf32>
    %91 = arith.maximumf %89, %90 : vector<8x512xf32>
    %92 = vector.broadcast %1 : f32 to vector<8x512xf32>
    %93 = arith.mulf %80, %92 : vector<8x512xf32>
    %94 = vector.broadcast %9 : f32 to vector<8x512xf32>
    %95 = arith.mulf %82, %94 : vector<8x512xf32>
    %96 = arith.addf %93, %95 : vector<8x512xf32>
    %97 = vector.broadcast %17 : f32 to vector<8x512xf32>
    %98 = arith.addf %96, %97 : vector<8x512xf32>
    %cst_3 = arith.constant 0.000000e+00 : f32
    %99 = vector.broadcast %cst_3 : f32 to vector<8x512xf32>
    %100 = arith.maximumf %98, %99 : vector<8x512xf32>
    %101 = vector.broadcast %2 : f32 to vector<8x512xf32>
    %102 = arith.mulf %80, %101 : vector<8x512xf32>
    %103 = vector.broadcast %10 : f32 to vector<8x512xf32>
    %104 = arith.mulf %82, %103 : vector<8x512xf32>
    %105 = arith.addf %102, %104 : vector<8x512xf32>
    %106 = vector.broadcast %18 : f32 to vector<8x512xf32>
    %107 = arith.addf %105, %106 : vector<8x512xf32>
    %cst_4 = arith.constant 0.000000e+00 : f32
    %108 = vector.broadcast %cst_4 : f32 to vector<8x512xf32>
    %109 = arith.maximumf %107, %108 : vector<8x512xf32>
    %110 = vector.broadcast %3 : f32 to vector<8x512xf32>
    %111 = arith.mulf %80, %110 : vector<8x512xf32>
    %112 = vector.broadcast %11 : f32 to vector<8x512xf32>
    %113 = arith.mulf %82, %112 : vector<8x512xf32>
    %114 = arith.addf %111, %113 : vector<8x512xf32>
    %115 = vector.broadcast %19 : f32 to vector<8x512xf32>
    %116 = arith.addf %114, %115 : vector<8x512xf32>
    %cst_5 = arith.constant 0.000000e+00 : f32
    %117 = vector.broadcast %cst_5 : f32 to vector<8x512xf32>
    %118 = arith.maximumf %116, %117 : vector<8x512xf32>
    %119 = vector.broadcast %4 : f32 to vector<8x512xf32>
    %120 = arith.mulf %80, %119 : vector<8x512xf32>
    %121 = vector.broadcast %12 : f32 to vector<8x512xf32>
    %122 = arith.mulf %82, %121 : vector<8x512xf32>
    %123 = arith.addf %120, %122 : vector<8x512xf32>
    %124 = vector.broadcast %20 : f32 to vector<8x512xf32>
    %125 = arith.addf %123, %124 : vector<8x512xf32>
    %cst_6 = arith.constant 0.000000e+00 : f32
    %126 = vector.broadcast %cst_6 : f32 to vector<8x512xf32>
    %127 = arith.maximumf %125, %126 : vector<8x512xf32>
    %128 = vector.broadcast %5 : f32 to vector<8x512xf32>
    %129 = arith.mulf %80, %128 : vector<8x512xf32>
    %130 = vector.broadcast %13 : f32 to vector<8x512xf32>
    %131 = arith.mulf %82, %130 : vector<8x512xf32>
    %132 = arith.addf %129, %131 : vector<8x512xf32>
    %133 = vector.broadcast %21 : f32 to vector<8x512xf32>
    %134 = arith.addf %132, %133 : vector<8x512xf32>
    %cst_7 = arith.constant 0.000000e+00 : f32
    %135 = vector.broadcast %cst_7 : f32 to vector<8x512xf32>
    %136 = arith.maximumf %134, %135 : vector<8x512xf32>
    %137 = vector.broadcast %6 : f32 to vector<8x512xf32>
    %138 = arith.mulf %80, %137 : vector<8x512xf32>
    %139 = vector.broadcast %14 : f32 to vector<8x512xf32>
    %140 = arith.mulf %82, %139 : vector<8x512xf32>
    %141 = arith.addf %138, %140 : vector<8x512xf32>
    %142 = vector.broadcast %22 : f32 to vector<8x512xf32>
    %143 = arith.addf %141, %142 : vector<8x512xf32>
    %cst_8 = arith.constant 0.000000e+00 : f32
    %144 = vector.broadcast %cst_8 : f32 to vector<8x512xf32>
    %145 = arith.maximumf %143, %144 : vector<8x512xf32>
    %146 = vector.broadcast %7 : f32 to vector<8x512xf32>
    %147 = arith.mulf %80, %146 : vector<8x512xf32>
    %148 = vector.broadcast %15 : f32 to vector<8x512xf32>
    %149 = arith.mulf %82, %148 : vector<8x512xf32>
    %150 = arith.addf %147, %149 : vector<8x512xf32>
    %151 = vector.broadcast %23 : f32 to vector<8x512xf32>
    %152 = arith.addf %150, %151 : vector<8x512xf32>
    %cst_9 = arith.constant 0.000000e+00 : f32
    %153 = vector.broadcast %cst_9 : f32 to vector<8x512xf32>
    %154 = arith.maximumf %152, %153 : vector<8x512xf32>
    %155 = vector.broadcast %24 : f32 to vector<8x512xf32>
    %156 = arith.mulf %91, %155 : vector<8x512xf32>
    %157 = vector.broadcast %28 : f32 to vector<8x512xf32>
    %158 = arith.mulf %100, %157 : vector<8x512xf32>
    %159 = arith.addf %156, %158 : vector<8x512xf32>
    %160 = vector.broadcast %32 : f32 to vector<8x512xf32>
    %161 = arith.mulf %109, %160 : vector<8x512xf32>
    %162 = arith.addf %159, %161 : vector<8x512xf32>
    %163 = vector.broadcast %36 : f32 to vector<8x512xf32>
    %164 = arith.mulf %118, %163 : vector<8x512xf32>
    %165 = arith.addf %162, %164 : vector<8x512xf32>
    %166 = vector.broadcast %40 : f32 to vector<8x512xf32>
    %167 = arith.mulf %127, %166 : vector<8x512xf32>
    %168 = arith.addf %165, %167 : vector<8x512xf32>
    %169 = vector.broadcast %44 : f32 to vector<8x512xf32>
    %170 = arith.mulf %136, %169 : vector<8x512xf32>
    %171 = arith.addf %168, %170 : vector<8x512xf32>
    %172 = vector.broadcast %48 : f32 to vector<8x512xf32>
    %173 = arith.mulf %145, %172 : vector<8x512xf32>
    %174 = arith.addf %171, %173 : vector<8x512xf32>
    %175 = vector.broadcast %52 : f32 to vector<8x512xf32>
    %176 = arith.mulf %154, %175 : vector<8x512xf32>
    %177 = arith.addf %174, %176 : vector<8x512xf32>
    %178 = vector.broadcast %56 : f32 to vector<8x512xf32>
    %179 = arith.addf %177, %178 : vector<8x512xf32>
    %cst_10 = arith.constant 0.000000e+00 : f32
    %180 = vector.broadcast %cst_10 : f32 to vector<8x512xf32>
    %181 = arith.maximumf %179, %180 : vector<8x512xf32>
    %182 = vector.broadcast %25 : f32 to vector<8x512xf32>
    %183 = arith.mulf %91, %182 : vector<8x512xf32>
    %184 = vector.broadcast %29 : f32 to vector<8x512xf32>
    %185 = arith.mulf %100, %184 : vector<8x512xf32>
    %186 = arith.addf %183, %185 : vector<8x512xf32>
    %187 = vector.broadcast %33 : f32 to vector<8x512xf32>
    %188 = arith.mulf %109, %187 : vector<8x512xf32>
    %189 = arith.addf %186, %188 : vector<8x512xf32>
    %190 = vector.broadcast %37 : f32 to vector<8x512xf32>
    %191 = arith.mulf %118, %190 : vector<8x512xf32>
    %192 = arith.addf %189, %191 : vector<8x512xf32>
    %193 = vector.broadcast %41 : f32 to vector<8x512xf32>
    %194 = arith.mulf %127, %193 : vector<8x512xf32>
    %195 = arith.addf %192, %194 : vector<8x512xf32>
    %196 = vector.broadcast %45 : f32 to vector<8x512xf32>
    %197 = arith.mulf %136, %196 : vector<8x512xf32>
    %198 = arith.addf %195, %197 : vector<8x512xf32>
    %199 = vector.broadcast %49 : f32 to vector<8x512xf32>
    %200 = arith.mulf %145, %199 : vector<8x512xf32>
    %201 = arith.addf %198, %200 : vector<8x512xf32>
    %202 = vector.broadcast %53 : f32 to vector<8x512xf32>
    %203 = arith.mulf %154, %202 : vector<8x512xf32>
    %204 = arith.addf %201, %203 : vector<8x512xf32>
    %205 = vector.broadcast %57 : f32 to vector<8x512xf32>
    %206 = arith.addf %204, %205 : vector<8x512xf32>
    %cst_11 = arith.constant 0.000000e+00 : f32
    %207 = vector.broadcast %cst_11 : f32 to vector<8x512xf32>
    %208 = arith.maximumf %206, %207 : vector<8x512xf32>
    %209 = vector.broadcast %26 : f32 to vector<8x512xf32>
    %210 = arith.mulf %91, %209 : vector<8x512xf32>
    %211 = vector.broadcast %30 : f32 to vector<8x512xf32>
    %212 = arith.mulf %100, %211 : vector<8x512xf32>
    %213 = arith.addf %210, %212 : vector<8x512xf32>
    %214 = vector.broadcast %34 : f32 to vector<8x512xf32>
    %215 = arith.mulf %109, %214 : vector<8x512xf32>
    %216 = arith.addf %213, %215 : vector<8x512xf32>
    %217 = vector.broadcast %38 : f32 to vector<8x512xf32>
    %218 = arith.mulf %118, %217 : vector<8x512xf32>
    %219 = arith.addf %216, %218 : vector<8x512xf32>
    %220 = vector.broadcast %42 : f32 to vector<8x512xf32>
    %221 = arith.mulf %127, %220 : vector<8x512xf32>
    %222 = arith.addf %219, %221 : vector<8x512xf32>
    %223 = vector.broadcast %46 : f32 to vector<8x512xf32>
    %224 = arith.mulf %136, %223 : vector<8x512xf32>
    %225 = arith.addf %222, %224 : vector<8x512xf32>
    %226 = vector.broadcast %50 : f32 to vector<8x512xf32>
    %227 = arith.mulf %145, %226 : vector<8x512xf32>
    %228 = arith.addf %225, %227 : vector<8x512xf32>
    %229 = vector.broadcast %54 : f32 to vector<8x512xf32>
    %230 = arith.mulf %154, %229 : vector<8x512xf32>
    %231 = arith.addf %228, %230 : vector<8x512xf32>
    %232 = vector.broadcast %58 : f32 to vector<8x512xf32>
    %233 = arith.addf %231, %232 : vector<8x512xf32>
    %cst_12 = arith.constant 0.000000e+00 : f32
    %234 = vector.broadcast %cst_12 : f32 to vector<8x512xf32>
    %235 = arith.maximumf %233, %234 : vector<8x512xf32>
    %236 = vector.broadcast %27 : f32 to vector<8x512xf32>
    %237 = arith.mulf %91, %236 : vector<8x512xf32>
    %238 = vector.broadcast %31 : f32 to vector<8x512xf32>
    %239 = arith.mulf %100, %238 : vector<8x512xf32>
    %240 = arith.addf %237, %239 : vector<8x512xf32>
    %241 = vector.broadcast %35 : f32 to vector<8x512xf32>
    %242 = arith.mulf %109, %241 : vector<8x512xf32>
    %243 = arith.addf %240, %242 : vector<8x512xf32>
    %244 = vector.broadcast %39 : f32 to vector<8x512xf32>
    %245 = arith.mulf %118, %244 : vector<8x512xf32>
    %246 = arith.addf %243, %245 : vector<8x512xf32>
    %247 = vector.broadcast %43 : f32 to vector<8x512xf32>
    %248 = arith.mulf %127, %247 : vector<8x512xf32>
    %249 = arith.addf %246, %248 : vector<8x512xf32>
    %250 = vector.broadcast %47 : f32 to vector<8x512xf32>
    %251 = arith.mulf %136, %250 : vector<8x512xf32>
    %252 = arith.addf %249, %251 : vector<8x512xf32>
    %253 = vector.broadcast %51 : f32 to vector<8x512xf32>
    %254 = arith.mulf %145, %253 : vector<8x512xf32>
    %255 = arith.addf %252, %254 : vector<8x512xf32>
    %256 = vector.broadcast %55 : f32 to vector<8x512xf32>
    %257 = arith.mulf %154, %256 : vector<8x512xf32>
    %258 = arith.addf %255, %257 : vector<8x512xf32>
    %259 = vector.broadcast %59 : f32 to vector<8x512xf32>
    %260 = arith.addf %258, %259 : vector<8x512xf32>
    %cst_13 = arith.constant 0.000000e+00 : f32
    %261 = vector.broadcast %cst_13 : f32 to vector<8x512xf32>
    %262 = arith.maximumf %260, %261 : vector<8x512xf32>
    %263 = vector.broadcast %60 : f32 to vector<8x512xf32>
    %264 = arith.mulf %181, %263 : vector<8x512xf32>
    %265 = vector.broadcast %62 : f32 to vector<8x512xf32>
    %266 = arith.mulf %208, %265 : vector<8x512xf32>
    %267 = arith.addf %264, %266 : vector<8x512xf32>
    %268 = vector.broadcast %64 : f32 to vector<8x512xf32>
    %269 = arith.mulf %235, %268 : vector<8x512xf32>
    %270 = arith.addf %267, %269 : vector<8x512xf32>
    %271 = vector.broadcast %66 : f32 to vector<8x512xf32>
    %272 = arith.mulf %262, %271 : vector<8x512xf32>
    %273 = arith.addf %270, %272 : vector<8x512xf32>
    %274 = vector.broadcast %68 : f32 to vector<8x512xf32>
    %275 = arith.addf %273, %274 : vector<8x512xf32>
    %cst_14 = arith.constant 0.000000e+00 : f32
    %276 = vector.broadcast %cst_14 : f32 to vector<8x512xf32>
    %277 = arith.maximumf %275, %276 : vector<8x512xf32>
    %278 = vector.broadcast %61 : f32 to vector<8x512xf32>
    %279 = arith.mulf %181, %278 : vector<8x512xf32>
    %280 = vector.broadcast %63 : f32 to vector<8x512xf32>
    %281 = arith.mulf %208, %280 : vector<8x512xf32>
    %282 = arith.addf %279, %281 : vector<8x512xf32>
    %283 = vector.broadcast %65 : f32 to vector<8x512xf32>
    %284 = arith.mulf %235, %283 : vector<8x512xf32>
    %285 = arith.addf %282, %284 : vector<8x512xf32>
    %286 = vector.broadcast %67 : f32 to vector<8x512xf32>
    %287 = arith.mulf %262, %286 : vector<8x512xf32>
    %288 = arith.addf %285, %287 : vector<8x512xf32>
    %289 = vector.broadcast %69 : f32 to vector<8x512xf32>
    %290 = arith.addf %288, %289 : vector<8x512xf32>
    %cst_15 = arith.constant 0.000000e+00 : f32
    %291 = vector.broadcast %cst_15 : f32 to vector<8x512xf32>
    %292 = arith.maximumf %290, %291 : vector<8x512xf32>
    %293 = vector.broadcast %70 : f32 to vector<8x512xf32>
    %294 = arith.mulf %277, %293 : vector<8x512xf32>
    %295 = vector.broadcast %71 : f32 to vector<8x512xf32>
    %296 = arith.mulf %292, %295 : vector<8x512xf32>
    %297 = arith.addf %294, %296 : vector<8x512xf32>
    %298 = vector.broadcast %72 : f32 to vector<8x512xf32>
    %299 = arith.addf %297, %298 : vector<8x512xf32>
    %300 = math.tanh %299 : vector<8x512xf32>
    %c0_16 = arith.constant 0 : index
    %301 = arith.index_cast %76 : i32 to index
    %302 = vector.load %arg3[%c0_16, %301] : memref<8x512xf32, #tpu.memory_space<vmem>>, vector<8x512xf32>
    tpu.vector_store %arg3[%c0_16, %301], %300 {strides = array<i32>} : memref<8x512xf32, #tpu.memory_space<vmem>>, vector<8x512xf32>,
    %c1_i32_17 = arith.constant 1 : i32
    return
  }
  func.func @transform_0(%arg0: i32) -> i32 {
    %c0_i32 = arith.constant 0 : i32
    %c0_i32_0 = arith.constant 0 : i32
    return %c0_i32 : i32
  }
  func.func @transform_1(%arg0: i32) -> (i32, i32, i32) {
    %c0_i32 = arith.constant 0 : i32
    %c0_i32_0 = arith.constant 0 : i32
    %c0_i32_1 = arith.constant 0 : i32
    return %c0_i32, %c0_i32_0, %arg0 : i32, i32, i32
  }
  func.func @transform_2(%arg0: i32) -> (i32, i32) {
    %c0_i32 = arith.constant 0 : i32
    %c0_i32_0 = arith.constant 0 : i32
    return %c0_i32, %arg0 : i32, i32
  }
}

</mosaic_0001>

<llo_original>
// kernel: policy_forward.1
$region0: #{policy_forward.1}
  #allocation0 [shape = 'u32[]', space=smem, size = 0x4, offset = 0x4, fixed_abs, tag = 'smem constant byte address 0x4 - core index']
  #allocation1 [shape = 'u32[144,128]{1,0:T(1,128)}', space=vmem, size = 0x12000, scoped, tag = 'internal scratch']
  %s0 = inlined_call_operand.vmem [shape: f32[73], index: 0, kind: input, shape index: {}]
  %s1 = inlined_call_operand.vmem [shape: f32[2,8,512], index: 1, kind: input, shape index: {}]
  %s2 = inlined_call_operand.vmem [shape: f32[8,512], index: 2, kind: output, shape index: {}]
  %s3 = sld [smem:[#allocation0]]
  $region22: #{policy_forward.1} parent=0
    _
  %s5 = ssub.s32 1, %s3
  %s6 = scalar_select 0, %s5, %s3
  $region1: #{policy_forward.1} parent=0
    #allocation2 [shape = 'u8[512]{0}', space=smem, size = 0x200, scoped, tag = 'input window, operand 0, single buffered']
    #allocation3 [shape = 's32[1]{0}', space=sflag, size = 0x4, scoped, tag = 'scoped memory for policy_forward.1']
    %7 = vsyncpa [#allocation3], 0
    // Predicated region
    $region2: #{policy_forward.1} parent=1 // pred_check
      _
    $region3: #{policy_forward.1} parent=1 // pred_check_branch
      %9 = sbr.rel (0) target = $region5
    $region4: #{policy_forward.1} parent=1 // pred_region
      %s11 = ssub.s32 16, 16
      %12 = vsyncadd [#allocation3], %s11
      %s14 = sshll.u32 %s0, 4
      %s15 = int_to_ptr.vmem [resolvable:$true] %s14
      %17 = dma.vmem_to_smem %s15, 16, [#allocation2], [#allocation3]
    $region5: #{policy_forward.1} parent=1 // pred_fallthru
      _
    // Predicated region
    $region6: #{policy_forward.1} parent=1 // pred_check
      _
    $region7: #{policy_forward.1} parent=1 // pred_check_branch
      %19 = sbr.rel (0) target = $region9
    $region8: #{policy_forward.1} parent=1 // pred_region
      _
    $region9: #{policy_forward.1} parent=1 // pred_fallthru
      _
    // Predicated region
    $region10: #{policy_forward.1} parent=1 // pred_check
      _
    $region11: #{policy_forward.1} parent=1 // pred_check_branch
      %21 = sbr.rel (0) target = $region13
    $region12: #{policy_forward.1} parent=1 // pred_region
      %22 = dma.done [#allocation3], 16
    $region13: #{policy_forward.1} parent=1 // pred_fallthru
      _
    %23 = sfence
    %s24 = sld [smem:[#allocation2]]
    %s25 = sld [smem:[#allocation2 + $0x1]]
    %s26 = sld [smem:[#allocation2 + $0x2]]
    %s27 = sld [smem:[#allocation2 + $0x3]]
    %s28 = sld [smem:[#allocation2 + $0x4]]
    %s29 = sld [smem:[#allocation2 + $0x5]]
    %s30 = sld [smem:[#allocation2 + $0x6]]
    %s31 = sld [smem:[#allocation2 + $0x7]]
    %s32 = sld [smem:[#allocation2 + $0x8]]
    %s33 = sld [smem:[#allocation2 + $0x9]]
    %s34 = sld [smem:[#allocation2 + $0xa]]
    %s35 = sld [smem:[#allocation2 + $0xb]]
    %s36 = sld [smem:[#allocation2 + $0xc]]
    %s37 = sld [smem:[#allocation2 + $0xd]]
    %s38 = sld [smem:[#allocation2 + $0xe]]
    %s39 = sld [smem:[#allocation2 + $0xf]]
    %s40 = sld [smem:[#allocation2 + $0x10]]
    %s41 = sld [smem:[#allocation2 + $0x11]]
    %s42 = sld [smem:[#allocation2 + $0x12]]
    %s43 = sld [smem:[#allocation2 + $0x13]]
    %s44 = sld [smem:[#allocation2 + $0x14]]
    %s45 = sld [smem:[#allocation2 + $0x15]]
    %s46 = sld [smem:[#allocation2 + $0x16]]
    %s47 = sld [smem:[#allocation2 + $0x17]]
    %s48 = sld [smem:[#allocation2 + $0x18]]
    %s49 = sld [smem:[#allocation2 + $0x19]]
    %s50 = sld [smem:[#allocation2 + $0x1a]]
    %s51 = sld [smem:[#allocation2 + $0x1b]]
    %s52 = sld [smem:[#allocation2 + $0x1c]]
    %s53 = sld [smem:[#allocation2 + $0x1d]]
    %s54 = sld [smem:[#allocation2 + $0x1e]]
    %s55 = sld [smem:[#allocation2 + $0x1f]]
    %s56 = sld [smem:[#allocation2 + $0x20]]
    %s57 = sld [smem:[#allocation2 + $0x21]]
    %s58 = sld [smem:[#allocation2 + $0x22]]
    %s59 = sld [smem:[#allocation2 + $0x23]]
    %s60 = sld [smem:[#allocation2 + $0x24]]
    %s61 = sld [smem:[#allocation2 + $0x25]]
    %s62 = sld [smem:[#allocation2 + $0x26]]
    %s63 = sld [smem:[#allocation2 + $0x27]]
    %s64 = sld [smem:[#allocation2 + $0x28]]
    %s65 = sld [smem:[#allocation2 + $0x29]]
    %s66 = sld [smem:[#allocation2 + $0x2a]]
    %s67 = sld [smem:[#allocation2 + $0x2b]]
    %s68 = sld [smem:[#allocation2 + $0x2c]]
    %s69 = sld [smem:[#allocation2 + $0x2d]]
    %s70 = sld [smem:[#allocation2 + $0x2e]]
    %s71 = sld [smem:[#allocation2 + $0x2f]]
    %s72 = sld [smem:[#allocation2 + $0x30]]
    %s73 = sld [smem:[#allocation2 + $0x31]]
    %s74 = sld [smem:[#allocation2 + $0x32]]
    %s75 = sld [smem:[#allocation2 + $0x33]]
    %s76 = sld [smem:[#allocation2 + $0x34]]
    %s77 = sld [smem:[#allocation2 + $0x35]]
    %s78 = sld [smem:[#allocation2 + $0x36]]
    %s79 = sld [smem:[#allocation2 + $0x37]]
    %s80 = sld [smem:[#allocation2 + $0x38]]
    %s81 = sld [smem:[#allocation2 + $0x39]]
    %s82 = sld [smem:[#allocation2 + $0x3a]]
    %s83 = sld [smem:[#allocation2 + $0x3b]]
    %s84 = sld [smem:[#allocation2 + $0x3c]]
    %s85 = sld [smem:[#allocation2 + $0x3d]]
    %s86 = sld [smem:[#allocation2 + $0x3e]]
    %s87 = sld [smem:[#allocation2 + $0x3f]]
    %s88 = sld [smem:[#allocation2 + $0x40]]
    %s89 = sld [smem:[#allocation2 + $0x41]]
    %s90 = sld [smem:[#allocation2 + $0x42]]
    %s91 = sld [smem:[#allocation2 + $0x43]]
    %s92 = sld [smem:[#allocation2 + $0x44]]
    %s93 = sld [smem:[#allocation2 + $0x45]]
    %s94 = sld [smem:[#allocation2 + $0x46]]
    %s95 = sld [smem:[#allocation2 + $0x47]]
    %s96 = sld [smem:[#allocation2 + $0x48]]
    %v97 = vld [vmem:[%s1] sm:$0xff]
    %v98 = vld [vmem:[%s1 + $0x8] sm:$0xff]
    %v99 = vld [vmem:[%s1 + $0x10] sm:$0xff]
    %v100 = vld [vmem:[%s1 + $0x18] sm:$0xff]
    %v101 = vld [vmem:[%s1 + $0x20] sm:$0xff]
    %v102 = vld [vmem:[%s1 + $0x28] sm:$0xff]
    %v103 = vld [vmem:[%s1 + $0x30] sm:$0xff]
    %v104 = vld [vmem:[%s1 + $0x38] sm:$0xff]
    %v105 = vstv %s24
    %v106 = vmul.f32 %v97, %v105
    %v107 = vmul.f32 %v98, %v105
    %v108 = vmul.f32 %v99, %v105
    %v109 = vmul.f32 %v100, %v105
    %v110 = vstv %s32
    %v111 = vmul.f32 %v101, %v110
    %v112 = vmul.f32 %v102, %v110
    %v113 = vmul.f32 %v103, %v110
    %v114 = vmul.f32 %v104, %v110
    %v115 = vadd.f32 %v106, %v111
    %v116 = vadd.f32 %v107, %v112
    %v117 = vadd.f32 %v108, %v113
    %v118 = vadd.f32 %v109, %v114
    %v119 = vstv %s40
    %v120 = vadd.f32 %v115, %v119
    %v121 = vadd.f32 %v116, %v119
    %v122 = vadd.f32 %v117, %v119
    %v123 = vadd.f32 %v118, %v119
    %v124 = vmax.f32 %v120, 0.0
    %v125 = vmax.f32 %v121, 0.0
    %v126 = vmax.f32 %v122, 0.0
    %v127 = vmax.f32 %v123, 0.0
    %v128 = vstv %s25
    %v129 = vmul.f32 %v97, %v128
    %v130 = vmul.f32 %v98, %v128
    %v131 = vmul.f32 %v99, %v128
    %v132 = vmul.f32 %v100, %v128
    %v133 = vstv %s33
    %v134 = vmul.f32 %v101, %v133
    %v135 = vmul.f32 %v102, %v133
    %v136 = vmul.f32 %v103, %v133
    %v137 = vmul.f32 %v104, %v133
    %v138 = vadd.f32 %v129, %v134
    %v139 = vadd.f32 %v130, %v135
    %v140 = vadd.f32 %v131, %v136
    %v141 = vadd.f32 %v132, %v137
    %v142 = vstv %s41
    %v143 = vadd.f32 %v138, %v142
    %v144 = vadd.f32 %v139, %v142
    %v145 = vadd.f32 %v140, %v142
    %v146 = vadd.f32 %v141, %v142
    %v147 = vmax.f32 %v143, 0.0
    %v148 = vmax.f32 %v144, 0.0
    %v149 = vmax.f32 %v145, 0.0
    %v150 = vmax.f32 %v146, 0.0
    %v151 = vstv %s26
    %v152 = vmul.f32 %v97, %v151
    %v153 = vmul.f32 %v98, %v151
    %v154 = vmul.f32 %v99, %v151
    %v155 = vmul.f32 %v100, %v151
    %v156 = vstv %s34
    %v157 = vmul.f32 %v101, %v156
    %v158 = vmul.f32 %v102, %v156
    %v159 = vmul.f32 %v103, %v156
    %v160 = vmul.f32 %v104, %v156
    %v161 = vadd.f32 %v152, %v157
    %v162 = vadd.f32 %v153, %v158
    %v163 = vadd.f32 %v154, %v159
    %v164 = vadd.f32 %v155, %v160
    %v165 = vstv %s42
    %v166 = vadd.f32 %v161, %v165
    %v167 = vadd.f32 %v162, %v165
    %v168 = vadd.f32 %v163, %v165
    %v169 = vadd.f32 %v164, %v165
    %v170 = vmax.f32 %v166, 0.0
    %v171 = vmax.f32 %v167, 0.0
    %v172 = vmax.f32 %v168, 0.0
    %v173 = vmax.f32 %v169, 0.0
    %v174 = vstv %s27
    %v175 = vmul.f32 %v97, %v174
    %v176 = vmul.f32 %v98, %v174
    %v177 = vmul.f32 %v99, %v174
    %v178 = vmul.f32 %v100, %v174
    %v179 = vstv %s35
    %v180 = vmul.f32 %v101, %v179
    %v181 = vmul.f32 %v102, %v179
    %v182 = vmul.f32 %v103, %v179
    %v183 = vmul.f32 %v104, %v179
    %v184 = vadd.f32 %v175, %v180
    %v185 = vadd.f32 %v176, %v181
    %v186 = vadd.f32 %v177, %v182
    %v187 = vadd.f32 %v178, %v183
    %v188 = vstv %s43
    %v189 = vadd.f32 %v184, %v188
    %v190 = vadd.f32 %v185, %v188
    %v191 = vadd.f32 %v186, %v188
    %v192 = vadd.f32 %v187, %v188
    %v193 = vmax.f32 %v189, 0.0
    %v194 = vmax.f32 %v190, 0.0
    %v195 = vmax.f32 %v191, 0.0
    %v196 = vmax.f32 %v192, 0.0
    %v197 = vstv %s28
    %v198 = vmul.f32 %v97, %v197
    %v199 = vmul.f32 %v98, %v197
    %v200 = vmul.f32 %v99, %v197
    %v201 = vmul.f32 %v100, %v197
    %v202 = vstv %s36
    %v203 = vmul.f32 %v101, %v202
    %v204 = vmul.f32 %v102, %v202
    %v205 = vmul.f32 %v103, %v202
    %v206 = vmul.f32 %v104, %v202
    %v207 = vadd.f32 %v198, %v203
    %v208 = vadd.f32 %v199, %v204
    %v209 = vadd.f32 %v200, %v205
    %v210 = vadd.f32 %v201, %v206
    %v211 = vstv %s44
    %v212 = vadd.f32 %v207, %v211
    %v213 = vadd.f32 %v208, %v211
    %v214 = vadd.f32 %v209, %v211
    %v215 = vadd.f32 %v210, %v211
    %v216 = vmax.f32 %v212, 0.0
    %v217 = vmax.f32 %v213, 0.0
    %v218 = vmax.f32 %v214, 0.0
    %v219 = vmax.f32 %v215, 0.0
    %v220 = vstv %s29
    %v221 = vmul.f32 %v97, %v220
    %v222 = vmul.f32 %v98, %v220
    %v223 = vmul.f32 %v99, %v220
    %v224 = vmul.f32 %v100, %v220
    %v225 = vstv %s37
    %v226 = vmul.f32 %v101, %v225
    %v227 = vmul.f32 %v102, %v225
    %v228 = vmul.f32 %v103, %v225
    %v229 = vmul.f32 %v104, %v225
    %v230 = vadd.f32 %v221, %v226
    %v231 = vadd.f32 %v222, %v227
    %v232 = vadd.f32 %v223, %v228
    %v233 = vadd.f32 %v224, %v229
    %v234 = vstv %s45
    %v235 = vadd.f32 %v230, %v234
    %v236 = vadd.f32 %v231, %v234
    %v237 = vadd.f32 %v232, %v234
    %v238 = vadd.f32 %v233, %v234
    %v239 = vmax.f32 %v235, 0.0
    %v240 = vmax.f32 %v236, 0.0
    %v241 = vmax.f32 %v237, 0.0
    %v242 = vmax.f32 %v238, 0.0
    %v243 = vstv %s30
    %v244 = vmul.f32 %v97, %v243
    %v245 = vmul.f32 %v98, %v243
    %v246 = vmul.f32 %v99, %v243
    %v247 = vmul.f32 %v100, %v243
    %v248 = vstv %s38
    %v249 = vmul.f32 %v101, %v248
    %v250 = vmul.f32 %v102, %v248
    %v251 = vmul.f32 %v103, %v248
    %v252 = vmul.f32 %v104, %v248
    %v253 = vadd.f32 %v244, %v249
    %v254 = vadd.f32 %v245, %v250
    %v255 = vadd.f32 %v246, %v251
    %v256 = vadd.f32 %v247, %v252
    %v257 = vstv %s46
    %v258 = vadd.f32 %v253, %v257
    %v259 = vadd.f32 %v254, %v257
    %v260 = vadd.f32 %v255, %v257
    %v261 = vadd.f32 %v256, %v257
    %v262 = vmax.f32 %v258, 0.0
    %v263 = vmax.f32 %v259, 0.0
    %v264 = vmax.f32 %v260, 0.0
    %v265 = vmax.f32 %v261, 0.0
    %v266 = vstv %s31
    %v267 = vmul.f32 %v97, %v266
    %v268 = vmul.f32 %v98, %v266
    %v269 = vmul.f32 %v99, %v266
    %v270 = vmul.f32 %v100, %v266
    %v271 = vstv %s39
    %v272 = vmul.f32 %v101, %v271
    %v273 = vmul.f32 %v102, %v271
    %v274 = vmul.f32 %v103, %v271
    %v275 = vmul.f32 %v104, %v271
    %v276 = vadd.f32 %v267, %v272
    %v277 = vadd.f32 %v268, %v273
    %v278 = vadd.f32 %v269, %v274
    %v279 = vadd.f32 %v270, %v275
    %v280 = vstv %s47
    %v281 = vadd.f32 %v276, %v280
    %v282 = vadd.f32 %v277, %v280
    %v283 = vadd.f32 %v278, %v280
    %v284 = vadd.f32 %v279, %v280
    %v285 = vmax.f32 %v281, 0.0
    %v286 = vmax.f32 %v282, 0.0
    %v287 = vmax.f32 %v283, 0.0
    %v288 = vmax.f32 %v284, 0.0
    %v289 = vstv %s48
    %v290 = vmul.f32 %v124, %v289
    %v291 = vmul.f32 %v125, %v289
    %v292 = vmul.f32 %v126, %v289
    %v293 = vmul.f32 %v127, %v289
    %v294 = vstv %s52
    %v295 = vmul.f32 %v147, %v294
    %v296 = vmul.f32 %v148, %v294
    %v297 = vmul.f32 %v149, %v294
    %v298 = vmul.f32 %v150, %v294
    %v299 = vadd.f32 %v290, %v295
    %v300 = vadd.f32 %v291, %v296
    %v301 = vadd.f32 %v292, %v297
    %v302 = vadd.f32 %v293, %v298
    %v303 = vstv %s56
    %v304 = vmul.f32 %v170, %v303
    %v305 = vmul.f32 %v171, %v303
    %v306 = vmul.f32 %v172, %v303
    %v307 = vmul.f32 %v173, %v303
    %v308 = vadd.f32 %v299, %v304
    %v309 = vadd.f32 %v300, %v305
    %v310 = vadd.f32 %v301, %v306
    %v311 = vadd.f32 %v302, %v307
    %v312 = vstv %s60
    %v313 = vmul.f32 %v193, %v312
    %v314 = vmul.f32 %v194, %v312
    %v315 = vmul.f32 %v195, %v312
    %v316 = vmul.f32 %v196, %v312
    %v317 = vadd.f32 %v308, %v313
    %v318 = vadd.f32 %v309, %v314
    %v319 = vadd.f32 %v310, %v315
    %v320 = vadd.f32 %v311, %v316
    %v321 = vstv %s64
    %v322 = vmul.f32 %v216, %v321
    %v323 = vmul.f32 %v217, %v321
    %v324 = vmul.f32 %v218, %v321
    %v325 = vmul.f32 %v219, %v321
    %v326 = vadd.f32 %v317, %v322
    %v327 = vadd.f32 %v318, %v323
    %v328 = vadd.f32 %v319, %v324
    %v329 = vadd.f32 %v320, %v325
    %v330 = vstv %s68
    %v331 = vmul.f32 %v239, %v330
    %v332 = vmul.f32 %v240, %v330
    %v333 = vmul.f32 %v241, %v330
    %v334 = vmul.f32 %v242, %v330
    %v335 = vadd.f32 %v326, %v331
    %v336 = vadd.f32 %v327, %v332
    %v337 = vadd.f32 %v328, %v333
    %v338 = vadd.f32 %v329, %v334
    %v339 = vstv %s72
    %v340 = vmul.f32 %v262, %v339
    %v341 = vmul.f32 %v263, %v339
    %v342 = vmul.f32 %v264, %v339
    %v343 = vmul.f32 %v265, %v339
    %v344 = vadd.f32 %v335, %v340
    %v345 = vadd.f32 %v336, %v341
    %v346 = vadd.f32 %v337, %v342
    %v347 = vadd.f32 %v338, %v343
    %v348 = vstv %s76
    %v349 = vmul.f32 %v285, %v348
    %v350 = vmul.f32 %v286, %v348
    %v351 = vmul.f32 %v287, %v348
    %v352 = vmul.f32 %v288, %v348
    %v353 = vadd.f32 %v344, %v349
    %v354 = vadd.f32 %v345, %v350
    %v355 = vadd.f32 %v346, %v351
    %v356 = vadd.f32 %v347, %v352
    %v357 = vstv %s80
    %v358 = vadd.f32 %v353, %v357
    %v359 = vadd.f32 %v354, %v357
    %v360 = vadd.f32 %v355, %v357
    %v361 = vadd.f32 %v356, %v357
    %v362 = vmax.f32 %v358, 0.0
    %v363 = vmax.f32 %v359, 0.0
    %v364 = vmax.f32 %v360, 0.0
    %v365 = vmax.f32 %v361, 0.0
    %v366 = vstv %s49
    %v367 = vmul.f32 %v124, %v366
    %v368 = vmul.f32 %v125, %v366
    %v369 = vmul.f32 %v126, %v366
    %v370 = vmul.f32 %v127, %v366
    %v371 = vstv %s53
    %v372 = vmul.f32 %v147, %v371
    %v373 = vmul.f32 %v148, %v371
    %v374 = vmul.f32 %v149, %v371
    %v375 = vmul.f32 %v150, %v371
    %v376 = vadd.f32 %v367, %v372
    %v377 = vadd.f32 %v368, %v373
    %v378 = vadd.f32 %v369, %v374
    %v379 = vadd.f32 %v370, %v375
    %v380 = vstv %s57
    %v381 = vmul.f32 %v170, %v380
    %v382 = vmul.f32 %v171, %v380
    %v383 = vmul.f32 %v172, %v380
    %v384 = vmul.f32 %v173, %v380
    %v385 = vadd.f32 %v376, %v381
    %v386 = vadd.f32 %v377, %v382
    %v387 = vadd.f32 %v378, %v383
    %v388 = vadd.f32 %v379, %v384
    %v389 = vstv %s61
    %v390 = vmul.f32 %v193, %v389
    %v391 = vmul.f32 %v194, %v389
    %v392 = vmul.f32 %v195, %v389
    %v393 = vmul.f32 %v196, %v389
    %v394 = vadd.f32 %v385, %v390
    %v395 = vadd.f32 %v386, %v391
    %v396 = vadd.f32 %v387, %v392
    %v397 = vadd.f32 %v388, %v393
    %v398 = vstv %s65
    %v399 = vmul.f32 %v216, %v398
    %v400 = vmul.f32 %v217, %v398
    %v401 = vmul.f32 %v218, %v398
    %v402 = vmul.f32 %v219, %v398
    %v403 = vadd.f32 %v394, %v399
    %v404 = vadd.f32 %v395, %v400
    %v405 = vadd.f32 %v396, %v401
    %v406 = vadd.f32 %v397, %v402
    %v407 = vstv %s69
    %v408 = vmul.f32 %v239, %v407
    %v409 = vmul.f32 %v240, %v407
    %v410 = vmul.f32 %v241, %v407
    %v411 = vmul.f32 %v242, %v407
    %v412 = vadd.f32 %v403, %v408
    %v413 = vadd.f32 %v404, %v409
    %v414 = vadd.f32 %v405, %v410
    %v415 = vadd.f32 %v406, %v411
    %v416 = vstv %s73
    %v417 = vmul.f32 %v262, %v416
    %v418 = vmul.f32 %v263, %v416
    %v419 = vmul.f32 %v264, %v416
    %v420 = vmul.f32 %v265, %v416
    %v421 = vadd.f32 %v412, %v417
    %v422 = vadd.f32 %v413, %v418
    %v423 = vadd.f32 %v414, %v419
    %v424 = vadd.f32 %v415, %v420
    %v425 = vstv %s77
    %v426 = vmul.f32 %v285, %v425
    %v427 = vmul.f32 %v286, %v425
    %v428 = vmul.f32 %v287, %v425
    %v429 = vmul.f32 %v288, %v425
    %v430 = vadd.f32 %v421, %v426
    %v431 = vadd.f32 %v422, %v427
    %v432 = vadd.f32 %v423, %v428
    %v433 = vadd.f32 %v424, %v429
    %v434 = vstv %s81
    %v435 = vadd.f32 %v430, %v434
    %v436 = vadd.f32 %v431, %v434
    %v437 = vadd.f32 %v432, %v434
    %v438 = vadd.f32 %v433, %v434
    %v439 = vmax.f32 %v435, 0.0
    %v440 = vmax.f32 %v436, 0.0
    %v441 = vmax.f32 %v437, 0.0
    %v442 = vmax.f32 %v438, 0.0
    %v443 = vstv %s50
    %v444 = vmul.f32 %v124, %v443
    %v445 = vmul.f32 %v125, %v443
    %v446 = vmul.f32 %v126, %v443
    %v447 = vmul.f32 %v127, %v443
    %v448 = vstv %s54
    %v449 = vmul.f32 %v147, %v448
    %v450 = vmul.f32 %v148, %v448
    %v451 = vmul.f32 %v149, %v448
    %v452 = vmul.f32 %v150, %v448
    %v453 = vadd.f32 %v444, %v449
    %v454 = vadd.f32 %v445, %v450
    %v455 = vadd.f32 %v446, %v451
    %v456 = vadd.f32 %v447, %v452
    %v457 = vstv %s58
    %v458 = vmul.f32 %v170, %v457
    %v459 = vmul.f32 %v171, %v457
    %v460 = vmul.f32 %v172, %v457
    %v461 = vmul.f32 %v173, %v457
    %v462 = vadd.f32 %v453, %v458
    %v463 = vadd.f32 %v454, %v459
    %v464 = vadd.f32 %v455, %v460
    %v465 = vadd.f32 %v456, %v461
    %v466 = vstv %s62
    %v467 = vmul.f32 %v193, %v466
    %v468 = vmul.f32 %v194, %v466
    %v469 = vmul.f32 %v195, %v466
    %v470 = vmul.f32 %v196, %v466
    %v471 = vadd.f32 %v462, %v467
    %v472 = vadd.f32 %v463, %v468
    %v473 = vadd.f32 %v464, %v469
    %v474 = vadd.f32 %v465, %v470
    %v475 = vstv %s66
    %v476 = vmul.f32 %v216, %v475
    %v477 = vmul.f32 %v217, %v475
    %v478 = vmul.f32 %v218, %v475
    %v479 = vmul.f32 %v219, %v475
    %v480 = vadd.f32 %v471, %v476
    %v481 = vadd.f32 %v472, %v477
    %v482 = vadd.f32 %v473, %v478
    %v483 = vadd.f32 %v474, %v479
    %v484 = vstv %s70
    %v485 = vmul.f32 %v239, %v484
    %v486 = vmul.f32 %v240, %v484
    %v487 = vmul.f32 %v241, %v484
    %v488 = vmul.f32 %v242, %v484
    %v489 = vadd.f32 %v480, %v485
    %v490 = vadd.f32 %v481, %v486
    %v491 = vadd.f32 %v482, %v487
    %v492 = vadd.f32 %v483, %v488
    %v493 = vstv %s74
    %v494 = vmul.f32 %v262, %v493
    %v495 = vmul.f32 %v263, %v493
    %v496 = vmul.f32 %v264, %v493
    %v497 = vmul.f32 %v265, %v493
    %v498 = vadd.f32 %v489, %v494
    %v499 = vadd.f32 %v490, %v495
    %v500 = vadd.f32 %v491, %v496
    %v501 = vadd.f32 %v492, %v497
    %v502 = vstv %s78
    %v503 = vmul.f32 %v285, %v502
    %v504 = vmul.f32 %v286, %v502
    %v505 = vmul.f32 %v287, %v502
    %v506 = vmul.f32 %v288, %v502
    %v507 = vadd.f32 %v498, %v503
    %v508 = vadd.f32 %v499, %v504
    %v509 = vadd.f32 %v500, %v505
    %v510 = vadd.f32 %v501, %v506
    %v511 = vstv %s82
    %v512 = vadd.f32 %v507, %v511
    %v513 = vadd.f32 %v508, %v511
    %v514 = vadd.f32 %v509, %v511
    %v515 = vadd.f32 %v510, %v511
    %v516 = vmax.f32 %v512, 0.0
    %v517 = vmax.f32 %v513, 0.0
    %v518 = vmax.f32 %v514, 0.0
    %v519 = vmax.f32 %v515, 0.0
    %v520 = vstv %s51
    %v521 = vmul.f32 %v124, %v520
    %v522 = vmul.f32 %v125, %v520
    %v523 = vmul.f32 %v126, %v520
    %v524 = vmul.f32 %v127, %v520
    %v525 = vstv %s55
    %v526 = vmul.f32 %v147, %v525
    %v527 = vmul.f32 %v148, %v525
    %v528 = vmul.f32 %v149, %v525
    %v529 = vmul.f32 %v150, %v525
    %v530 = vadd.f32 %v521, %v526
    %v531 = vadd.f32 %v522, %v527
    %v532 = vadd.f32 %v523, %v528
    %v533 = vadd.f32 %v524, %v529
    %v534 = vstv %s59
    %v535 = vmul.f32 %v170, %v534
    %v536 = vmul.f32 %v171, %v534
    %v537 = vmul.f32 %v172, %v534
    %v538 = vmul.f32 %v173, %v534
    %v539 = vadd.f32 %v530, %v535
    %v540 = vadd.f32 %v531, %v536
    %v541 = vadd.f32 %v532, %v537
    %v542 = vadd.f32 %v533, %v538
    %v543 = vstv %s63
    %v544 = vmul.f32 %v193, %v543
    %v545 = vmul.f32 %v194, %v543
    %v546 = vmul.f32 %v195, %v543
    %v547 = vmul.f32 %v196, %v543
    %v548 = vadd.f32 %v539, %v544
    %v549 = vadd.f32 %v540, %v545
    %v550 = vadd.f32 %v541, %v546
    %v551 = vadd.f32 %v542, %v547
    %v552 = vstv %s67
    %v553 = vmul.f32 %v216, %v552
    %v554 = vmul.f32 %v217, %v552
    %v555 = vmul.f32 %v218, %v552
    %v556 = vmul.f32 %v219, %v552
    %v557 = vadd.f32 %v548, %v553
    %v558 = vadd.f32 %v549, %v554
    %v559 = vadd.f32 %v550, %v555
    %v560 = vadd.f32 %v551, %v556
    %v561 = vstv %s71
    %v562 = vmul.f32 %v239, %v561
    %v563 = vmul.f32 %v240, %v561
    %v564 = vmul.f32 %v241, %v561
    %v565 = vmul.f32 %v242, %v561
    %v566 = vadd.f32 %v557, %v562
    %v567 = vadd.f32 %v558, %v563
    %v568 = vadd.f32 %v559, %v564
    %v569 = vadd.f32 %v560, %v565
    %v570 = vstv %s75
    %v571 = vmul.f32 %v262, %v570
    %v572 = vmul.f32 %v263, %v570
    %v573 = vmul.f32 %v264, %v570
    %v574 = vmul.f32 %v265, %v570
    %v575 = vadd.f32 %v566, %v571
    %v576 = vadd.f32 %v567, %v572
    %v577 = vadd.f32 %v568, %v573
    %v578 = vadd.f32 %v569, %v574
    %v579 = vstv %s79
    %v580 = vmul.f32 %v285, %v579
    %v581 = vmul.f32 %v286, %v579
    %v582 = vmul.f32 %v287, %v579
    %v583 = vmul.f32 %v288, %v579
    %v584 = vadd.f32 %v575, %v580
    %v585 = vadd.f32 %v576, %v581
    %v586 = vadd.f32 %v577, %v582
    %v587 = vadd.f32 %v578, %v583
    %v588 = vstv %s83
    %v589 = vadd.f32 %v584, %v588
    %v590 = vadd.f32 %v585, %v588
    %v591 = vadd.f32 %v586, %v588
    %v592 = vadd.f32 %v587, %v588
    %v593 = vmax.f32 %v589, 0.0
    %v594 = vmax.f32 %v590, 0.0
    %v595 = vmax.f32 %v591, 0.0
    %v596 = vmax.f32 %v592, 0.0
    %v597 = vstv %s84
    %v598 = vmul.f32 %v362, %v597
    %v599 = vmul.f32 %v363, %v597
    %v600 = vmul.f32 %v364, %v597
    %v601 = vmul.f32 %v365, %v597
    %v602 = vstv %s86
    %v603 = vmul.f32 %v439, %v602
    %v604 = vmul.f32 %v440, %v602
    %v605 = vmul.f32 %v441, %v602
    %v606 = vmul.f32 %v442, %v602
    %v607 = vadd.f32 %v598, %v603
    %v608 = vadd.f32 %v599, %v604
    %v609 = vadd.f32 %v600, %v605
    %v610 = vadd.f32 %v601, %v606
    %v611 = vstv %s88
    %v612 = vmul.f32 %v516, %v611
    %v613 = vmul.f32 %v517, %v611
    %v614 = vmul.f32 %v518, %v611
    %v615 = vmul.f32 %v519, %v611
    %v616 = vadd.f32 %v607, %v612
    %v617 = vadd.f32 %v608, %v613
    %v618 = vadd.f32 %v609, %v614
    %v619 = vadd.f32 %v610, %v615
    %v620 = vstv %s90
    %v621 = vmul.f32 %v593, %v620
    %v622 = vmul.f32 %v594, %v620
    %v623 = vmul.f32 %v595, %v620
    %v624 = vmul.f32 %v596, %v620
    %v625 = vadd.f32 %v616, %v621
    %v626 = vadd.f32 %v617, %v622
    %v627 = vadd.f32 %v618, %v623
    %v628 = vadd.f32 %v619, %v624
    %v629 = vstv %s92
    %v630 = vadd.f32 %v625, %v629
    %v631 = vadd.f32 %v626, %v629
    %v632 = vadd.f32 %v627, %v629
    %v633 = vadd.f32 %v628, %v629
    %v634 = vmax.f32 %v630, 0.0
    %v635 = vmax.f32 %v631, 0.0
    %v636 = vmax.f32 %v632, 0.0
    %v637 = vmax.f32 %v633, 0.0
    %v638 = vstv %s85
    %v639 = vmul.f32 %v362, %v638
    %v640 = vmul.f32 %v363, %v638
    %v641 = vmul.f32 %v364, %v638
    %v642 = vmul.f32 %v365, %v638
    %v643 = vstv %s87
    %v644 = vmul.f32 %v439, %v643
    %v645 = vmul.f32 %v440, %v643
    %v646 = vmul.f32 %v441, %v643
    %v647 = vmul.f32 %v442, %v643
    %v648 = vadd.f32 %v639, %v644
    %v649 = vadd.f32 %v640, %v645
    %v650 = vadd.f32 %v641, %v646
    %v651 = vadd.f32 %v642, %v647
    %v652 = vstv %s89
    %v653 = vmul.f32 %v516, %v652
    %v654 = vmul.f32 %v517, %v652
    %v655 = vmul.f32 %v518, %v652
    %v656 = vmul.f32 %v519, %v652
    %v657 = vadd.f32 %v648, %v653
    %v658 = vadd.f32 %v649, %v654
    %v659 = vadd.f32 %v650, %v655
    %v660 = vadd.f32 %v651, %v656
    %v661 = vstv %s91
    %v662 = vmul.f32 %v593, %v661
    %v663 = vmul.f32 %v594, %v661
    %v664 = vmul.f32 %v595, %v661
    %v665 = vmul.f32 %v596, %v661
    %v666 = vadd.f32 %v657, %v662
    %v667 = vadd.f32 %v658, %v663
    %v668 = vadd.f32 %v659, %v664
    %v669 = vadd.f32 %v660, %v665
    %v670 = vstv %s93
    %v671 = vadd.f32 %v666, %v670
    %v672 = vadd.f32 %v667, %v670
    %v673 = vadd.f32 %v668, %v670
    %v674 = vadd.f32 %v669, %v670
    %v675 = vmax.f32 %v671, 0.0
    %v676 = vmax.f32 %v672, 0.0
    %v677 = vmax.f32 %v673, 0.0
    %v678 = vmax.f32 %v674, 0.0
    %v679 = vstv %s94
    %v680 = vmul.f32 %v634, %v679
    %v681 = vmul.f32 %v635, %v679
    %v682 = vmul.f32 %v636, %v679
    %v683 = vmul.f32 %v637, %v679
    %v684 = vstv %s95
    %v685 = vmul.f32 %v675, %v684
    %v686 = vmul.f32 %v676, %v684
    %v687 = vmul.f32 %v677, %v684
    %v688 = vmul.f32 %v678, %v684
    %v689 = vadd.f32 %v680, %v685
    %v690 = vadd.f32 %v681, %v686
    %v691 = vadd.f32 %v682, %v687
    %v692 = vadd.f32 %v683, %v688
    %v693 = vstv %s96
    %v694 = vadd.f32 %v689, %v693
    %v695 = vadd.f32 %v690, %v693
    %v696 = vadd.f32 %v691, %v693
    %v697 = vadd.f32 %v692, %v693
    %v698 = vtanh.pop %v694
    %v699 = vtanh.pop %v695
    %v700 = vtanh.pop %v696
    %v701 = vtanh.pop %v697
    %702 = vst [vmem:[%s2] sm:$0xff] %v698
    %703 = vst [vmem:[%s2 + $0x8] sm:$0xff] %v699
    %704 = vst [vmem:[%s2 + $0x10] sm:$0xff] %v700
    %705 = vst [vmem:[%s2 + $0x18] sm:$0xff] %v701
    // Predicated region
    $region14: #{policy_forward.1} parent=1 // pred_check
      _
    $region15: #{policy_forward.1} parent=1 // pred_check_branch
      %707 = sbr.rel (0) target = $region17
    $region16: #{policy_forward.1} parent=1 // pred_region
      _
    $region17: #{policy_forward.1} parent=1 // pred_fallthru
      _
    // Predicated region
    $region18: #{policy_forward.1} parent=1 // pred_check
      _
    $region19: #{policy_forward.1} parent=1 // pred_check_branch
      %709 = sbr.rel (0) target = $region21
    $region20: #{policy_forward.1} parent=1 // pred_region
      _
    $region21: #{policy_forward.1} parent=1 // pred_fallthru
      _
    %710 = vsyncpa [#allocation3], 1

</llo_original>
